<compile_context>
chip_gen: v5e
topology: v5e:2x2
jax: 0.10.0
libtpu: 0.0.40
codegen_flags: <defaults>
</compile_context>

<pallas_src>
import functools

import jax
import jax.numpy as jnp
from jax import lax
from jax.experimental import pallas as pl
from jax.experimental.pallas import tpu as pltpu


_TAPS = ((-1, -1), (-1, 0), (-1, 1),
         (0, -1),  (0, 0),  (0, 1),
         (1, -1),  (1, 0),  (1, 1))


# --------------------------------------------------------------------------
# Pallas kernel
# --------------------------------------------------------------------------
def mbconv_kernel(W,
                  x_ref, w_ref, tab_ref, masks_ref,
                  wser_t_ref, bser_ref, wsee_ref,
                  o_ref):
    NB = x_ref.shape[0]
    HW = x_ref.shape[-1]
    mm_dtype = w_ref.dtype

    # Stacked 1x1-conv weights (BN scales already folded in at the wrapper).
    w1, wpw, w2 = w_ref[0], w_ref[1], w_ref[2]

    # Per-channel f32 table: [b1', wdw'(9 taps), t2, t3, bsee, b2]
    tab = tab_ref[...]
    b1 = tab[:, 0:1]
    wdw = tab[:, 1:10]
    t2 = tab[:, 10:11]
    t3 = tab[:, 11:12]
    bsee = tab[:, 12:13]
    b2 = tab[:, 13:14]

    wser_t = wser_t_ref[...]          # (C, RDp)
    bser = bser_ref[...]              # (1, RDp)
    wsee = wsee_ref[...]              # (C, RDp)

    def tap(base, k, lane_shift):
        # result[:, i] = base[:, i + dx]   (lane_shift == -dx); boundary taps masked
        r = base if lane_shift == 0 else pltpu.roll(base, lane_shift % HW, axis=1)
        return r * masks_ref[k] * wdw[:, k:k + 1]

    for b in range(NB):
        x_act = x_ref[b]                               # (C, HW) activation dtype (bf16)
        x = x_act.astype(jnp.float32)

        # BN1 folded into w1/b1; Conv1x1(+bias): MXU matmul, f32 accumulate.
        h = jnp.dot(w1, x_act.astype(mm_dtype),
                    preferred_element_type=jnp.float32) + b1

        dsc_in = h

        # --- DepthwiseSeparableConv ---
        # depthwise 3x3, stride 1, pad 1 (BN2 scale folded into the taps):
        # two big row rolls + six single-lane rolls (XLU slot).
        h_up = pltpu.roll(h, W, axis=1)                # h_up[:, i] = h[:, i - W]
        h_dn = pltpu.roll(h, HW - W, axis=1)           # h_dn[:, i] = h[:, i + W]
        acc = h * wdw[:, 4:5]                          # center tap, no mask
        acc = acc + tap(h_up, 0, 1) + tap(h_up, 1, 0) + tap(h_up, 2, -1)
        acc = acc + tap(h,    3, 1)                   + tap(h,    5, -1)
        acc = acc + tap(h_dn, 6, 1) + tap(h_dn, 7, 0) + tap(h_dn, 8, -1)

        # BN2 shift + tanh-approx GELU (EUP slot instead of long erf polynomial).
        h = jax.nn.gelu(acc + t2, approximate=True)

        # pointwise 1x1 (BN3 scale folded into rows) + BN3 shift + DSC residual.
        h = jnp.dot(wpw, h.astype(mm_dtype), preferred_element_type=jnp.float32)
        h = h + t3 + dsc_in

        # --- SqueezeExcite (tiny M=1 matmuls kept on VPU/XLU, off the MXU) ---
        mean = jnp.mean(h, axis=1, keepdims=True)                      # (C, 1)
        se = jnp.sum(wser_t * mean, axis=0, keepdims=True)             # (1, RDp)
        se = jnp.maximum(se + bser, 0.0)                               # ReLU
        se = jnp.sum(wsee * se, axis=1, keepdims=True)                 # (C, 1)
        h = h * jax.nn.sigmoid(se + bsee)

        # final 1x1 conv (+bias)
        h = jnp.dot(w2, h.astype(mm_dtype),
                    preferred_element_type=jnp.float32) + b2

        # skip path (Identity) + lane-dense store (bf16)
        o_ref[b] = (h + x).astype(o_ref.dtype)


# --------------------------------------------------------------------------
# Wrapper (native NCHW in/out, no transposes)
# --------------------------------------------------------------------------
def mbconv_pallas(x_nchw, p, *, eps=1e-5, act_dtype=jnp.bfloat16, batch_block=None):
    N, C, H, W = x_nchw.shape
    HW = H * W
    f32 = jnp.float32

    # 256x256 MXUs (v6e/v7x) are badly underutilized at small C: skip the bf16
    # weight/activation casts there and keep the 1x1 matmuls in f32.
    matmul_dtype = jnp.float32 if C <= 32 else jnp.bfloat16

    def bn_fold(pref):
        s = (p[pref + '_g'] / jnp.sqrt(p[pref + '_v'] + eps)).astype(f32)
        t = (p[pref + '_b'] - p[pref + '_m'] * s).astype(f32)
        return s, t

    s1, t1 = bn_fold('bn1')
    s2, t2 = bn_fold('bn2')
    s3, t3 = bn_fold('bn3')

    # Fold BN affines into the adjacent conv weights (exact, f32 host-side):
    w1_f = p['w1'].astype(f32) * s1[None, :]                      # BN1 scale -> columns
    b1_f = p['w1'].astype(f32) @ t1 + p['b1'].astype(f32)         # BN1 shift -> conv bias
    wdw_f = p['wdw'].reshape(C, 9).astype(f32) * s2[:, None]      # BN2 scale -> 9 taps
    wpw_f = p['wpw'].astype(f32) * s3[:, None]                    # BN3 scale -> rows
    w2_f = p['w2'].astype(f32)
    b2_f = p['b2'].astype(f32)

    # SqueezeExcite: zero-pad the tiny reduced dim to a full 128-lane vector.
    RD = p['wser'].shape[0]
    RDp = ((RD + 127) // 128) * 128
    wser_t = jnp.pad(p['wser'].astype(f32).T, ((0, 0), (0, RDp - RD)))      # (C, RDp)
    bser = jnp.pad(p['bser'].astype(f32).reshape(1, -1), ((0, 0), (0, RDp - RD)))
    wsee = jnp.pad(p['wsee'].astype(f32), ((0, 0), (0, RDp - RD)))          # (C, RDp)

    # Per-channel f32 table (C, 14): [b1', wdw'(9), t2, t3, bsee, b2]
    tab = jnp.concatenate(
        [b1_f.reshape(C, 1), wdw_f, t2.reshape(C, 1), t3.reshape(C, 1),
         p['bsee'].astype(f32).reshape(C, 1), b2_f.reshape(C, 1)], axis=1)

    # Stacked 1x1-conv weights (3, C, C).
    w_blob = jnp.stack([w1_f, wpw_f, w2_f], axis=0).astype(matmul_dtype)

    # Grid-invariant per-tap boundary masks (9, 1, HW), built once host-side.
    rows = jnp.arange(HW, dtype=jnp.int32) // W
    cols = jnp.arange(HW, dtype=jnp.int32) % W
    masks = jnp.stack(
        [((rows + dy >= 0) & (rows + dy < H) & (cols + dx >= 0) & (cols + dx < W))
         for dy, dx in _TAPS], axis=0).astype(f32).reshape(9, 1, HW)

    # Batch blocking: amortize per-grid-step overhead, keep >=2 parallel steps
    # (megacore / v7x 2 TCs), and stay well under VMEM (v7x has only 64 MiB physical).
    if batch_block is None:
        per_img = 4 * C * HW * jnp.dtype(act_dtype).itemsize   # in+out, double-buffered
        budget_imgs = max(1, (8 * 1024 * 1024) // per_img)
        batch_block = 1
        for d in range(1, N + 1):
            if N % d == 0 and d <= budget_imgs and N // d >= min(2, N):
                batch_block = d
    NB = batch_block
    assert N % NB == 0

    # bf16 activation stream (halves HBM traffic on the DMA-bound path).
    x = x_nchw.reshape(N, C, HW).astype(act_dtype)

    params = [w_blob, tab, masks, wser_t, bser, wsee]
    in_specs = [pl.BlockSpec((NB, C, HW), lambda n: (n, 0, 0))]
    for a in params:
        in_specs.append(pl.BlockSpec(a.shape, lambda n, _z=(0,) * a.ndim: _z))

    out = pl.pallas_call(
        functools.partial(mbconv_kernel, W),
        out_shape=jax.ShapeDtypeStruct((N, C, HW), act_dtype),
        grid=(N // NB,),
        in_specs=in_specs,
        out_specs=pl.BlockSpec((NB, C, HW), lambda n: (n, 0, 0)),
        compiler_params=pltpu.CompilerParams(
            dimension_semantics=("parallel",),      # batch blocks over cores
            vmem_limit_bytes=32 * 1024 * 1024,      # > v5e 16 MiB default, < v7x 64 MiB
        ),
    )(x, *params)

    return out.reshape(N, C, H, W)


# --------------------------------------------------------------------------
# Pure-JAX reference (NCHW, lax.conv, f32, exact GELU) for validation
# --------------------------------------------------------------------------
def mbconv_ref(x, p, eps=1e-5):
    N, C, H, W = x.shape

    def bn(v, g, b, m, var):
        s = g / jnp.sqrt(var + eps)
        return v * s[None, :, None, None] + (b - m * s)[None, :, None, None]

    def conv1x1(v, w_oi, b=None):
        y = lax.conv_general_dilated(v, w_oi[:, :, None, None], (1, 1), 'VALID',
                                     dimension_numbers=('NCHW', 'OIHW', 'NCHW'),
                                     precision=lax.Precision.HIGHEST)
        return y if b is None else y + b[None, :, None, None]

    h = bn(x, p['bn1_g'], p['bn1_b'], p['bn1_m'], p['bn1_v'])
    h = conv1x1(h, p['w1'], p['b1'])
    dsc_in = h
    h = lax.conv_general_dilated(h, p['wdw'][:, None, :, :], (1, 1),
                                 ((1, 1), (1, 1)),
                                 dimension_numbers=('NCHW', 'OIHW', 'NCHW'),
                                 feature_group_count=C,
                                 precision=lax.Precision.HIGHEST)
    h = bn(h, p['bn2_g'], p['bn2_b'], p['bn2_m'], p['bn2_v'])
    h = jax.nn.gelu(h, approximate=False)
    h = conv1x1(h, p['wpw'])
    h = bn(h, p['bn3_g'], p['bn3_b'], p['bn3_m'], p['bn3_v'])
    h = h + dsc_in
    se = jnp.mean(h, axis=(2, 3), keepdims=True)
    se = jax.nn.relu(conv1x1(se, p['wser'], p['bser']))
    se = conv1x1(se, p['wsee'], p['bsee'])
    h = h * jax.nn.sigmoid(se)
    h = conv1x1(h, p['w2'], p['b2'])
    return h + x


# --------------------------------------------------------------------------
if __name__ == "__main__":
    N, C, H, W = 2, 8, 16, 16          # in_channels == out_channels (downscale=False)
    RD = max(1, round(C * 0.25))       # SqueezeExcite reduced channels

    key = jax.random.PRNGKey(0)
    ks = jax.random.split(key, 24)

    def nrm(k, shape, scale=0.1):
        return scale * jax.random.normal(k, shape, jnp.float32)

    p = {
        # BatchNorm2d (MBConv pre-norm)
        'bn1_g': 1.0 + nrm(ks[0], (C,)), 'bn1_b': nrm(ks[1], (C,)),
        'bn1_m': nrm(ks[2], (C,)),       'bn1_v': 1.0 + 0.1 * jax.random.uniform(ks[3], (C,)),
        # Conv1x1 in->in, (out,in) orientation, with bias
        'w1': nrm(ks[4], (C, C)), 'b1': nrm(ks[5], (C,)),
        # depthwise 3x3 (no bias), PyTorch-style (C, 3, 3)
        'wdw': nrm(ks[6], (C, 3, 3)),
        # BN + GELU inside DSC
        'bn2_g': 1.0 + nrm(ks[7], (C,)), 'bn2_b': nrm(ks[8], (C,)),
        'bn2_m': nrm(ks[9], (C,)),       'bn2_v': 1.0 + 0.1 * jax.random.uniform(ks[10], (C,)),
        # pointwise 1x1 in->out (no bias)
        'wpw': nrm(ks[11], (C, C)),
        # BN (no act) inside DSC
        'bn3_g': 1.0 + nrm(ks[12], (C,)), 'bn3_b': nrm(ks[13], (C,)),
        'bn3_m': nrm(ks[14], (C,)),       'bn3_v': 1.0 + 0.1 * jax.random.uniform(ks[15], (C,)),
        # SqueezeExcite: reduce (RD, C) + bias, expand (C, RD) + bias
        'wser': nrm(ks[16], (RD, C)), 'bser': nrm(ks[17], (RD,)),
        'wsee': nrm(ks[18], (C, RD)), 'bsee': nrm(ks[19], (C,)),
        # final Conv1x1 out->out with bias
        'w2': nrm(ks[20], (C, C)), 'b2': nrm(ks[21], (C,)),
    }

    x = jax.random.normal(ks[22], (N, C, H, W), jnp.float32)   # NCHW like PyTorch

    out = mbconv_pallas(x, p)          # bf16 activation stream in/out
    jax.block_until_ready(out)

    # Validate against the f32 lax.conv reference, fed the same bf16-rounded input
    # so the comparison isolates kernel error (bf16 output store + tanh GELU) from
    # input quantization.
    x_q = x.astype(jnp.bfloat16).astype(jnp.float32)
    ref = mbconv_ref(x_q, p)
    err = float(jnp.max(jnp.abs(out.astype(jnp.float32) - ref)))
    assert out.shape == (N, C, H, W) and err < 2e-2, f"mismatch: max|diff|={err}"
    print("KERNEL_OK")
</pallas_src>

<mosaic_0001>
module attributes {stable_mosaic.version = 11 : i64} {
  func.func @mbconv_kernel(%arg0: i32, %arg1: memref<1x8x256xbf16, #tpu.memory_space<vmem>>, %arg2: memref<3x8x8xf32, #tpu.memory_space<vmem>>, %arg3: memref<8x14xf32, #tpu.memory_space<vmem>>, %arg4: memref<9x1x256xf32, #tpu.memory_space<vmem>>, %arg5: memref<8x128xf32, #tpu.memory_space<vmem>>, %arg6: memref<1x128xf32, #tpu.memory_space<vmem>>, %arg7: memref<8x128xf32, #tpu.memory_space<vmem>>, %arg8: memref<1x8x256xbf16, #tpu.memory_space<vmem>>) attributes {dimension_semantics = [#tpu.dimension_semantics<parallel>], iteration_bounds = array<i64: 2>, scalar_prefetch = 0 : i64, scratch_operands = 0 : i64, tpu.core_type = #tpu.core_type<tc>, window_params = [{transform_indices = @transform_0, window_bounds = array<i64: 1, 8, 256>}, {pipeline_mode = #tpu.pipeline_mode<synchronous>, transform_indices = @transform_1, window_bounds = array<i64: 3, 8, 8>}, {pipeline_mode = #tpu.pipeline_mode<synchronous>, transform_indices = @transform_2, window_bounds = array<i64: 8, 14>}, {pipeline_mode = #tpu.pipeline_mode<synchronous>, transform_indices = @transform_3, window_bounds = array<i64: 9, 1, 256>}, {pipeline_mode = #tpu.pipeline_mode<synchronous>, transform_indices = @transform_4, window_bounds = array<i64: 8, 128>}, {pipeline_mode = #tpu.pipeline_mode<synchronous>, transform_indices = @transform_5, window_bounds = array<i64: 1, 128>}, {pipeline_mode = #tpu.pipeline_mode<synchronous>, transform_indices = @transform_6, window_bounds = array<i64: 8, 128>}, {transform_indices = @transform_7, window_bounds = array<i64: 1, 8, 256>}]} {
    %c0 = arith.constant 0 : index
    %c0_0 = arith.constant 0 : index
    %c0_1 = arith.constant 0 : index
    %0 = vector.load %arg2[%c0, %c0_0, %c0_1] : memref<3x8x8xf32, #tpu.memory_space<vmem>>, vector<1x8x8xf32>
    %1 = vector.shape_cast %0 : vector<1x8x8xf32> to vector<8x8xf32>
    %c1 = arith.constant 1 : index
    %c0_2 = arith.constant 0 : index
    %c0_3 = arith.constant 0 : index
    %2 = vector.load %arg2[%c1, %c0_2, %c0_3] : memref<3x8x8xf32, #tpu.memory_space<vmem>>, vector<1x8x8xf32>
    %3 = vector.shape_cast %2 : vector<1x8x8xf32> to vector<8x8xf32>
    %c2 = arith.constant 2 : index
    %c0_4 = arith.constant 0 : index
    %c0_5 = arith.constant 0 : index
    %4 = vector.load %arg2[%c2, %c0_4, %c0_5] : memref<3x8x8xf32, #tpu.memory_space<vmem>>, vector<1x8x8xf32>
    %5 = vector.shape_cast %4 : vector<1x8x8xf32> to vector<8x8xf32>
    %c0_6 = arith.constant 0 : index
    %c0_7 = arith.constant 0 : index
    %6 = vector.load %arg3[%c0_6, %c0_7] : memref<8x14xf32, #tpu.memory_space<vmem>>, vector<8x14xf32>
    %7 = vector.extract_strided_slice %6 {offsets = [0, 0], sizes = [8, 1], strides = [1, 1]} : vector<8x14xf32> to vector<8x1xf32>
    %8 = vector.extract_strided_slice %6 {offsets = [0, 1], sizes = [8, 9], strides = [1, 1]} : vector<8x14xf32> to vector<8x9xf32>
    %9 = vector.extract_strided_slice %6 {offsets = [0, 10], sizes = [8, 1], strides = [1, 1]} : vector<8x14xf32> to vector<8x1xf32>
    %10 = vector.extract_strided_slice %6 {offsets = [0, 11], sizes = [8, 1], strides = [1, 1]} : vector<8x14xf32> to vector<8x1xf32>
    %11 = vector.extract_strided_slice %6 {offsets = [0, 12], sizes = [8, 1], strides = [1, 1]} : vector<8x14xf32> to vector<8x1xf32>
    %12 = vector.extract_strided_slice %6 {offsets = [0, 13], sizes = [8, 1], strides = [1, 1]} : vector<8x14xf32> to vector<8x1xf32>
    %c0_8 = arith.constant 0 : index
    %c0_9 = arith.constant 0 : index
    %13 = vector.load %arg5[%c0_8, %c0_9] : memref<8x128xf32, #tpu.memory_space<vmem>>, vector<8x128xf32>
    %c0_10 = arith.constant 0 : index
    %c0_11 = arith.constant 0 : index
    %14 = vector.load %arg6[%c0_10, %c0_11] : memref<1x128xf32, #tpu.memory_space<vmem>>, vector<1x128xf32>
    %c0_12 = arith.constant 0 : index
    %c0_13 = arith.constant 0 : index
    %15 = vector.load %arg7[%c0_12, %c0_13] : memref<8x128xf32, #tpu.memory_space<vmem>>, vector<8x128xf32>
    %c0_14 = arith.constant 0 : index
    %c0_15 = arith.constant 0 : index
    %c0_16 = arith.constant 0 : index
    %16 = vector.load %arg1[%c0_14, %c0_15, %c0_16] : memref<1x8x256xbf16, #tpu.memory_space<vmem>>, vector<1x8x256xbf16>
    %17 = vector.shape_cast %16 : vector<1x8x256xbf16> to vector<8x256xbf16>
    %18 = arith.extf %17 : vector<8x256xbf16> to vector<8x256xf32>
    %19 = arith.extf %17 : vector<8x256xbf16> to vector<8x256xf32>
    %cst = arith.constant dense<0.000000e+00> : vector<8x256xf32>
    %20 = tpu.matmul %1, %19, %cst {dimension_numbers = #tpu.dot_dimension_numbers<[1], [0], [0], [1], [0, 0, 1, 1], [], []>} : vector<8x8xf32>, vector<8x256xf32>, vector<8x256xf32> -> vector<8x256xf32>
    %21 = vector.broadcast %7 : vector<8x1xf32> to vector<8x256xf32>
    %22 = arith.addf %20, %21 : vector<8x256xf32>
    %c16_i32 = arith.constant 16 : i32
    %23 = tpu.dynamic_rotate %22 by %c16_i32 dim 1 : vector<8x256xf32>, i32 -> vector<8x256xf32>
    %c240_i32 = arith.constant 240 : i32
    %24 = tpu.dynamic_rotate %22 by %c240_i32 dim 1 : vector<8x256xf32>, i32 -> vector<8x256xf32>
    %25 = vector.extract_strided_slice %8 {offsets = [0, 4], sizes = [8, 1], strides = [1, 1]} : vector<8x9xf32> to vector<8x1xf32>
    %26 = vector.broadcast %25 : vector<8x1xf32> to vector<8x256xf32>
    %27 = arith.mulf %22, %26 : vector<8x256xf32>
    %c1_i32 = arith.constant 1 : i32
    %28 = tpu.dynamic_rotate %23 by %c1_i32 dim 1 : vector<8x256xf32>, i32 -> vector<8x256xf32>
    %c0_17 = arith.constant 0 : index
    %c0_18 = arith.constant 0 : index
    %c0_19 = arith.constant 0 : index
    %29 = vector.load %arg4[%c0_17, %c0_18, %c0_19] : memref<9x1x256xf32, #tpu.memory_space<vmem>>, vector<1x1x256xf32>
    %30 = vector.shape_cast %29 : vector<1x1x256xf32> to vector<1x256xf32>
    %31 = vector.broadcast %30 : vector<1x256xf32> to vector<8x256xf32>
    %32 = arith.mulf %28, %31 : vector<8x256xf32>
    %33 = vector.extract_strided_slice %8 {offsets = [0, 0], sizes = [8, 1], strides = [1, 1]} : vector<8x9xf32> to vector<8x1xf32>
    %34 = vector.broadcast %33 : vector<8x1xf32> to vector<8x256xf32>
    %35 = arith.mulf %32, %34 : vector<8x256xf32>
    %36 = arith.addf %27, %35 : vector<8x256xf32>
    %c1_20 = arith.constant 1 : index
    %c0_21 = arith.constant 0 : index
    %c0_22 = arith.constant 0 : index
    %37 = vector.load %arg4[%c1_20, %c0_21, %c0_22] : memref<9x1x256xf32, #tpu.memory_space<vmem>>, vector<1x1x256xf32>
    %38 = vector.shape_cast %37 : vector<1x1x256xf32> to vector<1x256xf32>
    %39 = vector.broadcast %38 : vector<1x256xf32> to vector<8x256xf32>
    %40 = arith.mulf %23, %39 : vector<8x256xf32>
    %41 = vector.extract_strided_slice %8 {offsets = [0, 1], sizes = [8, 1], strides = [1, 1]} : vector<8x9xf32> to vector<8x1xf32>
    %42 = vector.broadcast %41 : vector<8x1xf32> to vector<8x256xf32>
    %43 = arith.mulf %40, %42 : vector<8x256xf32>
    %44 = arith.addf %36, %43 : vector<8x256xf32>
    %c255_i32 = arith.constant 255 : i32
    %45 = tpu.dynamic_rotate %23 by %c255_i32 dim 1 : vector<8x256xf32>, i32 -> vector<8x256xf32>
    %c2_23 = arith.constant 2 : index
    %c0_24 = arith.constant 0 : index
    %c0_25 = arith.constant 0 : index
    %46 = vector.load %arg4[%c2_23, %c0_24, %c0_25] : memref<9x1x256xf32, #tpu.memory_space<vmem>>, vector<1x1x256xf32>
    %47 = vector.shape_cast %46 : vector<1x1x256xf32> to vector<1x256xf32>
    %48 = vector.broadcast %47 : vector<1x256xf32> to vector<8x256xf32>
    %49 = arith.mulf %45, %48 : vector<8x256xf32>
    %50 = vector.extract_strided_slice %8 {offsets = [0, 2], sizes = [8, 1], strides = [1, 1]} : vector<8x9xf32> to vector<8x1xf32>
    %51 = vector.broadcast %50 : vector<8x1xf32> to vector<8x256xf32>
    %52 = arith.mulf %49, %51 : vector<8x256xf32>
    %53 = arith.addf %44, %52 : vector<8x256xf32>
    %c1_i32_26 = arith.constant 1 : i32
    %54 = tpu.dynamic_rotate %22 by %c1_i32_26 dim 1 : vector<8x256xf32>, i32 -> vector<8x256xf32>
    %c3 = arith.constant 3 : index
    %c0_27 = arith.constant 0 : index
    %c0_28 = arith.constant 0 : index
    %55 = vector.load %arg4[%c3, %c0_27, %c0_28] : memref<9x1x256xf32, #tpu.memory_space<vmem>>, vector<1x1x256xf32>
    %56 = vector.shape_cast %55 : vector<1x1x256xf32> to vector<1x256xf32>
    %57 = vector.broadcast %56 : vector<1x256xf32> to vector<8x256xf32>
    %58 = arith.mulf %54, %57 : vector<8x256xf32>
    %59 = vector.extract_strided_slice %8 {offsets = [0, 3], sizes = [8, 1], strides = [1, 1]} : vector<8x9xf32> to vector<8x1xf32>
    %60 = vector.broadcast %59 : vector<8x1xf32> to vector<8x256xf32>
    %61 = arith.mulf %58, %60 : vector<8x256xf32>
    %62 = arith.addf %53, %61 : vector<8x256xf32>
    %c255_i32_29 = arith.constant 255 : i32
    %63 = tpu.dynamic_rotate %22 by %c255_i32_29 dim 1 : vector<8x256xf32>, i32 -> vector<8x256xf32>
    %c5 = arith.constant 5 : index
    %c0_30 = arith.constant 0 : index
    %c0_31 = arith.constant 0 : index
    %64 = vector.load %arg4[%c5, %c0_30, %c0_31] : memref<9x1x256xf32, #tpu.memory_space<vmem>>, vector<1x1x256xf32>
    %65 = vector.shape_cast %64 : vector<1x1x256xf32> to vector<1x256xf32>
    %66 = vector.broadcast %65 : vector<1x256xf32> to vector<8x256xf32>
    %67 = arith.mulf %63, %66 : vector<8x256xf32>
    %68 = vector.extract_strided_slice %8 {offsets = [0, 5], sizes = [8, 1], strides = [1, 1]} : vector<8x9xf32> to vector<8x1xf32>
    %69 = vector.broadcast %68 : vector<8x1xf32> to vector<8x256xf32>
    %70 = arith.mulf %67, %69 : vector<8x256xf32>
    %71 = arith.addf %62, %70 : vector<8x256xf32>
    %c1_i32_32 = arith.constant 1 : i32
    %72 = tpu.dynamic_rotate %24 by %c1_i32_32 dim 1 : vector<8x256xf32>, i32 -> vector<8x256xf32>
    %c6 = arith.constant 6 : index
    %c0_33 = arith.constant 0 : index
    %c0_34 = arith.constant 0 : index
    %73 = vector.load %arg4[%c6, %c0_33, %c0_34] : memref<9x1x256xf32, #tpu.memory_space<vmem>>, vector<1x1x256xf32>
    %74 = vector.shape_cast %73 : vector<1x1x256xf32> to vector<1x256xf32>
    %75 = vector.broadcast %74 : vector<1x256xf32> to vector<8x256xf32>
    %76 = arith.mulf %72, %75 : vector<8x256xf32>
    %77 = vector.extract_strided_slice %8 {offsets = [0, 6], sizes = [8, 1], strides = [1, 1]} : vector<8x9xf32> to vector<8x1xf32>
    %78 = vector.broadcast %77 : vector<8x1xf32> to vector<8x256xf32>
    %79 = arith.mulf %76, %78 : vector<8x256xf32>
    %80 = arith.addf %71, %79 : vector<8x256xf32>
    %c7 = arith.constant 7 : index
    %c0_35 = arith.constant 0 : index
    %c0_36 = arith.constant 0 : index
    %81 = vector.load %arg4[%c7, %c0_35, %c0_36] : memref<9x1x256xf32, #tpu.memory_space<vmem>>, vector<1x1x256xf32>
    %82 = vector.shape_cast %81 : vector<1x1x256xf32> to vector<1x256xf32>
    %83 = vector.broadcast %82 : vector<1x256xf32> to vector<8x256xf32>
    %84 = arith.mulf %24, %83 : vector<8x256xf32>
    %85 = vector.extract_strided_slice %8 {offsets = [0, 7], sizes = [8, 1], strides = [1, 1]} : vector<8x9xf32> to vector<8x1xf32>
    %86 = vector.broadcast %85 : vector<8x1xf32> to vector<8x256xf32>
    %87 = arith.mulf %84, %86 : vector<8x256xf32>
    %88 = arith.addf %80, %87 : vector<8x256xf32>
    %c255_i32_37 = arith.constant 255 : i32
    %89 = tpu.dynamic_rotate %24 by %c255_i32_37 dim 1 : vector<8x256xf32>, i32 -> vector<8x256xf32>
    %c8 = arith.constant 8 : index
    %c0_38 = arith.constant 0 : index
    %c0_39 = arith.constant 0 : index
    %90 = vector.load %arg4[%c8, %c0_38, %c0_39] : memref<9x1x256xf32, #tpu.memory_space<vmem>>, vector<1x1x256xf32>
    %91 = vector.shape_cast %90 : vector<1x1x256xf32> to vector<1x256xf32>
    %92 = vector.broadcast %91 : vector<1x256xf32> to vector<8x256xf32>
    %93 = arith.mulf %89, %92 : vector<8x256xf32>
    %94 = vector.extract_strided_slice %8 {offsets = [0, 8], sizes = [8, 1], strides = [1, 1]} : vector<8x9xf32> to vector<8x1xf32>
    %95 = vector.broadcast %94 : vector<8x1xf32> to vector<8x256xf32>
    %96 = arith.mulf %93, %95 : vector<8x256xf32>
    %97 = arith.addf %88, %96 : vector<8x256xf32>
    %98 = vector.broadcast %9 : vector<8x1xf32> to vector<8x256xf32>
    %99 = arith.addf %97, %98 : vector<8x256xf32>
    %100 = arith.mulf %99, %99 : vector<8x256xf32>
    %101 = arith.mulf %99, %100 : vector<8x256xf32>
    %cst_40 = arith.constant 4.471500e-02 : f32
    %102 = vector.broadcast %cst_40 : f32 to vector<8x256xf32>
    %103 = arith.mulf %102, %101 : vector<8x256xf32>
    %104 = arith.addf %99, %103 : vector<8x256xf32>
    %cst_41 = arith.constant 0.797884583 : f32
    %105 = vector.broadcast %cst_41 : f32 to vector<8x256xf32>
    %106 = arith.mulf %105, %104 : vector<8x256xf32>
    %107 = math.tanh %106 : vector<8x256xf32>
    %cst_42 = arith.constant 1.000000e+00 : f32
    %108 = vector.broadcast %cst_42 : f32 to vector<8x256xf32>
    %109 = arith.addf %108, %107 : vector<8x256xf32>
    %cst_43 = arith.constant 5.000000e-01 : f32
    %110 = vector.broadcast %cst_43 : f32 to vector<8x256xf32>
    %111 = arith.mulf %110, %109 : vector<8x256xf32>
    %112 = arith.mulf %99, %111 : vector<8x256xf32>
    %cst_44 = arith.constant dense<0.000000e+00> : vector<8x256xf32>
    %113 = tpu.matmul %3, %112, %cst_44 {dimension_numbers = #tpu.dot_dimension_numbers<[1], [0], [0], [1], [0, 0, 1, 1], [], []>} : vector<8x8xf32>, vector<8x256xf32>, vector<8x256xf32> -> vector<8x256xf32>
    %114 = vector.broadcast %10 : vector<8x1xf32> to vector<8x256xf32>
    %115 = arith.addf %113, %114 : vector<8x256xf32>
    %116 = arith.addf %115, %22 : vector<8x256xf32>
    %cst_45 = arith.constant dense<0.000000e+00> : vector<8xf32>
    %117 = vector.multi_reduction <add>, %116, %cst_45 [1] : vector<8x256xf32> to vector<8xf32>
    %118 = vector.shape_cast %117 : vector<8xf32> to vector<8x1xf32>
    %cst_46 = arith.constant 2.560000e+02 : f32
    %119 = vector.broadcast %cst_46 : f32 to vector<8x1xf32>
    %120 = arith.divf %118, %119 : vector<8x1xf32>
    %121 = vector.broadcast %120 : vector<8x1xf32> to vector<8x128xf32>
    %122 = arith.mulf %13, %121 : vector<8x128xf32>
    %cst_47 = arith.constant dense<0.000000e+00> : vector<128xf32>
    %123 = vector.multi_reduction <add>, %122, %cst_47 [0] : vector<8x128xf32> to vector<128xf32>
    %124 = vector.shape_cast %123 : vector<128xf32> to vector<1x128xf32>
    %125 = arith.addf %124, %14 : vector<1x128xf32>
    %cst_48 = arith.constant 0.000000e+00 : f32
    %126 = vector.broadcast %cst_48 : f32 to vector<1x128xf32>
    %127 = arith.maximumf %125, %126 : vector<1x128xf32>
    %128 = vector.broadcast %127 : vector<1x128xf32> to vector<8x128xf32>
    %129 = arith.mulf %15, %128 : vector<8x128xf32>
    %cst_49 = arith.constant dense<0.000000e+00> : vector<8xf32>
    %130 = vector.multi_reduction <add>, %129, %cst_49 [1] : vector<8x128xf32> to vector<8xf32>
    %131 = vector.shape_cast %130 : vector<8xf32> to vector<8x1xf32>
    %132 = arith.addf %131, %11 : vector<8x1xf32>
    %133 = arith.negf %132 : vector<8x1xf32>
    %134 = math.exp %133 : vector<8x1xf32>
    %cst_50 = arith.constant 1.000000e+00 : f32
    %135 = vector.broadcast %cst_50 : f32 to vector<8x1xf32>
    %136 = arith.addf %135, %134 : vector<8x1xf32>
    %137 = arith.divf %135, %136 : vector<8x1xf32>
    %138 = vector.broadcast %137 : vector<8x1xf32> to vector<8x256xf32>
    %139 = arith.mulf %116, %138 : vector<8x256xf32>
    %cst_51 = arith.constant dense<0.000000e+00> : vector<8x256xf32>
    %140 = tpu.matmul %5, %139, %cst_51 {dimension_numbers = #tpu.dot_dimension_numbers<[1], [0], [0], [1], [0, 0, 1, 1], [], []>} : vector<8x8xf32>, vector<8x256xf32>, vector<8x256xf32> -> vector<8x256xf32>
    %141 = vector.broadcast %12 : vector<8x1xf32> to vector<8x256xf32>
    %142 = arith.addf %140, %141 : vector<8x256xf32>
    %143 = arith.addf %142, %18 : vector<8x256xf32>
    %144 = arith.truncf %143 : vector<8x256xf32> to vector<8x256xbf16>
    %c0_52 = arith.constant 0 : index
    %c0_53 = arith.constant 0 : index
    %c0_54 = arith.constant 0 : index
    %145 = vector.load %arg8[%c0_52, %c0_53, %c0_54] : memref<1x8x256xbf16, #tpu.memory_space<vmem>>, vector<1x8x256xbf16>
    %146 = vector.shape_cast %145 : vector<1x8x256xbf16> to vector<8x256xbf16>
    %147 = vector.shape_cast %144 : vector<8x256xbf16> to vector<1x8x256xbf16>
    tpu.vector_store %arg8[%c0_52, %c0_53, %c0_54], %147 {strides = array<i32>} : memref<1x8x256xbf16, #tpu.memory_space<vmem>>, vector<1x8x256xbf16>,
    return
  }
  func.func @transform_0(%arg0: i32) -> (i32, i32, i32) {
    %c0_i32 = arith.constant 0 : i32
    %c0_i32_0 = arith.constant 0 : i32
    %c0_i32_1 = arith.constant 0 : i32
    return %arg0, %c0_i32, %c0_i32_0 : i32, i32, i32
  }
  func.func @transform_1(%arg0: i32) -> (i32, i32, i32) {
    %c0_i32 = arith.constant 0 : i32
    %c0_i32_0 = arith.constant 0 : i32
    %c0_i32_1 = arith.constant 0 : i32
    %c0_i32_2 = arith.constant 0 : i32
    return %c0_i32, %c0_i32_0, %c0_i32_1 : i32, i32, i32
  }
  func.func @transform_2(%arg0: i32) -> (i32, i32) {
    %c0_i32 = arith.constant 0 : i32
    %c0_i32_0 = arith.constant 0 : i32
    %c0_i32_1 = arith.constant 0 : i32
    return %c0_i32, %c0_i32_0 : i32, i32
  }
  func.func @transform_3(%arg0: i32) -> (i32, i32, i32) {
    %c0_i32 = arith.constant 0 : i32
    %c0_i32_0 = arith.constant 0 : i32
    %c0_i32_1 = arith.constant 0 : i32
    %c0_i32_2 = arith.constant 0 : i32
    return %c0_i32, %c0_i32_0, %c0_i32_1 : i32, i32, i32
  }
  func.func @transform_4(%arg0: i32) -> (i32, i32) {
    %c0_i32 = arith.constant 0 : i32
    %c0_i32_0 = arith.constant 0 : i32
    %c0_i32_1 = arith.constant 0 : i32
    return %c0_i32, %c0_i32_0 : i32, i32
  }
  func.func @transform_5(%arg0: i32) -> (i32, i32) {
    %c0_i32 = arith.constant 0 : i32
    %c0_i32_0 = arith.constant 0 : i32
    %c0_i32_1 = arith.constant 0 : i32
    return %c0_i32, %c0_i32_0 : i32, i32
  }
  func.func @transform_6(%arg0: i32) -> (i32, i32) {
    %c0_i32 = arith.constant 0 : i32
    %c0_i32_0 = arith.constant 0 : i32
    %c0_i32_1 = arith.constant 0 : i32
    return %c0_i32, %c0_i32_0 : i32, i32
  }
  func.func @transform_7(%arg0: i32) -> (i32, i32, i32) {
    %c0_i32 = arith.constant 0 : i32
    %c0_i32_0 = arith.constant 0 : i32
    %c0_i32_1 = arith.constant 0 : i32
    return %arg0, %c0_i32, %c0_i32_0 : i32, i32, i32
  }
}

</mosaic_0001>

<llo_original>
// kernel: tpu_custom_call.1
$region0: #{tpu_custom_call.1}
  #allocation0 [shape = 'u32[]', space=smem, size = 0x4, offset = 0x4, fixed_abs, tag = 'smem constant byte address 0x4 - core index']
  #allocation1 [shape = 'u32[72,128]{1,0:T(1,128)}', space=vmem, size = 0x9000, scoped, tag = 'internal scratch']
  %s0 = inlined_call_operand.hbm [shape: bf16[2,8,256], index: 0, kind: input, shape index: {}]
  %s1 = inlined_call_operand.hbm [shape: f32[3,8,8], index: 1, kind: input, shape index: {}]
  %s2 = inlined_call_operand.hbm [shape: f32[8,14], index: 2, kind: input, shape index: {}]
  %s3 = inlined_call_operand.hbm [shape: f32[9,1,256], index: 3, kind: input, shape index: {}]
  %s4 = inlined_call_operand.hbm [shape: f32[8,128], index: 4, kind: input, shape index: {}]
  %s5 = inlined_call_operand.vmem [shape: f32[1,128], index: 5, kind: input, shape index: {}]
  %s6 = inlined_call_operand.hbm [shape: f32[8,128], index: 6, kind: input, shape index: {}]
  %s7 = inlined_call_operand.hbm [shape: bf16[2,8,256], index: 7, kind: output, shape index: {}]
  %s8 = sld [smem:[#allocation0]]
  $region85: #{tpu_custom_call.1} parent=0
    _
  %s10 = ssub.s32 1, %s8
  %s11 = scalar_select 0, %s10, %s8
  $region1: #{tpu_custom_call.1} parent=0
    #allocation2 [shape = 'u8[8192]{0}', space=vmem, size = 0x2000, scoped, tag = 'input window, operand 0']
    #allocation3 [shape = 's32[2]{0}', space=sflag, size = 0x8, scoped, tag = 'scoped memory for tpu_custom_call.1']
    #allocation4 [shape = 's32[2]{0}', space=sflag, size = 0x8, scoped, tag = 'scoped memory for tpu_custom_call.1']
    #allocation5 [shape = 'u8[12288]{0}', space=vmem, size = 0x3000, scoped, tag = 'input window, operand 1, single buffered']
    #allocation6 [shape = 's32[1]{0}', space=sflag, size = 0x4, scoped, tag = 'scoped memory for tpu_custom_call.1']
    #allocation7 [shape = 'u8[4096]{0}', space=vmem, size = 0x1000, scoped, tag = 'input window, operand 2, single buffered']
    #allocation8 [shape = 'u8[9216]{0}', space=vmem, size = 0x2400, scoped, tag = 'input window, operand 3, single buffered']
    #allocation9 [shape = 's32[1]{0}', space=sflag, size = 0x4, scoped, tag = 'scoped memory for tpu_custom_call.1']
    #allocation10 [shape = 'u8[4096]{0}', space=vmem, size = 0x1000, scoped, tag = 'input window, operand 4, single buffered']
    #allocation11 [shape = 'u8[4096]{0}', space=vmem, size = 0x1000, scoped, tag = 'input window, operand 6, single buffered']
    #allocation12 [shape = 's32[1]{0}', space=sflag, size = 0x4, scoped, tag = 'scoped memory for tpu_custom_call.1']
    #allocation13 [shape = 'u8[8192]{0}', space=vmem, size = 0x2000, scoped, tag = 'output window, operand 0']
    %12 = vsyncpa [#allocation3], 0
    %s13 = scalar_lea.sflag [#allocation3], 1
    %14 = vsyncpa %s13, 0
    %15 = vsyncpa [#allocation6], 0
    %16 = vsyncpa [#allocation9], 0
    %17 = vsyncpa [#allocation12], 0
    %18 = vsyncpa [#allocation4], 0
    %s19 = scalar_lea.sflag [#allocation4], 1
    %20 = vsyncpa %s19, 0
    loop: start=0, step=1, limit=4
    $region2: #{tpu_custom_call.1} parent=1 // loop_pre_header
      _
    $region3: #{tpu_custom_call.1} parent=1 // loop_header
      %s22 = sphi 0, %s26
      %p23 = scmp.ge.s32.totalorder %s22, 4
      %s32 = sphi 0, %s34
      %s35 = sphi 0, %s32
      %s36 = sphi 0, %s35
      %s52 = sphi 0, %s36
      %s56 = sphi 0, %s56
      %s58 = sphi 0, %s56
      %s59 = sphi 0, %s58
      %s73 = sphi 0, %s59
      %s77 = sphi 0, %s77
      %s79 = sphi 0, %s77
      %s80 = sphi 0, %s79
      %s94 = sphi 0, %s80
      %s98 = sphi 0, %s98
      %s100 = sphi 0, %s98
      %s101 = sphi 0, %s100
      %s115 = sphi 0, %s101
      %s119 = sphi 0, %s119
      %s121 = sphi 0, %s119
      %s122 = sphi 0, %s121
      %s136 = sphi 0, %s122
      %s140 = sphi 0, %s140
      %s142 = sphi 0, %s140
      %s143 = sphi 0, %s142
      %s157 = sphi 0, %s143
      %s161 = sphi 0, %s161
      %s163 = sphi 0, %s161
      %s164 = sphi 0, %s163
      %s178 = sphi 0, %s164
      %s184 = sphi 0, %s186
      %s187 = sphi 0, %s184
      %s188 = sphi 0, %s187
      %s204 = sphi 0, %s188
    $region4: #{tpu_custom_call.1} parent=1 // loop_header_branch
      %25 = sbr.rel (%p23) target = $region8
    $region5: #{tpu_custom_call.1} parent=1 // loop_body
      %s27 = ssub.s32 %s22, 1
      %s28 = ssub.s32 %s22, 2
      %s29 = sadd.s32 %s22, 1
      %s30 = ssub.s32 %s22, %s29
      %p31 = scmp.eq.s32.totalorder %s30, 0
      %s33 = sadd.s32 %s32, 1
      %s34 = scalar_select %p31, %s32, %s33
      %p37 = pneg %p31
      %p38 = scmp.eq.s32.totalorder %s22, 1
      %p39 = por %p37, %p38
      %p40 = scmp.ne.s32.totalorder %s32, %s35
      %p41 = scmp.eq.s32.totalorder %s22, 0
      %p42 = por %p40, %p41
      %p43 = scmp.ne.s32.totalorder %s32, %s35
      %p44 = scmp.eq.s32.totalorder %s27, 1
      %p45 = por %p43, %p44
      %p46 = scmp.ne.s32.totalorder %s35, %s36
      %p47 = scmp.eq.s32.totalorder %s27, 0
      %p48 = por %p46, %p47
      %p49 = scmp.ne.s32.totalorder %s35, %s36
      %p50 = scmp.eq.s32.totalorder %s28, 1
      %p51 = por %p49, %p50
      %p53 = scmp.ne.s32.totalorder %s36, %s52
      %p54 = scmp.eq.s32.totalorder %s28, 0
      %p55 = por %p53, %p54
      %s57 = sadd.s32 %s56, 1
      %p60 = scmp.eq.s32.totalorder %s22, 1
      %p61 = scmp.ne.s32.totalorder %s56, %s58
      %p62 = scmp.eq.s32.totalorder %s22, 0
      %p63 = por %p61, %p62
      %p64 = scmp.ne.s32.totalorder %s56, %s58
      %p65 = scmp.eq.s32.totalorder %s27, 1
      %p66 = por %p64, %p65
      %p67 = scmp.ne.s32.totalorder %s58, %s59
      %p68 = scmp.eq.s32.totalorder %s27, 0
      %p69 = por %p67, %p68
      %p70 = scmp.ne.s32.totalorder %s58, %s59
      %p71 = scmp.eq.s32.totalorder %s28, 1
      %p72 = por %p70, %p71
      %p74 = scmp.ne.s32.totalorder %s59, %s73
      %p75 = scmp.eq.s32.totalorder %s28, 0
      %p76 = por %p74, %p75
      %s78 = sadd.s32 %s77, 1
      %p81 = scmp.eq.s32.totalorder %s22, 1
      %p82 = scmp.ne.s32.totalorder %s77, %s79
      %p83 = scmp.eq.s32.totalorder %s22, 0
      %p84 = por %p82, %p83
      %p85 = scmp.ne.s32.totalorder %s77, %s79
      %p86 = scmp.eq.s32.totalorder %s27, 1
      %p87 = por %p85, %p86
      %p88 = scmp.ne.s32.totalorder %s79, %s80
      %p89 = scmp.eq.s32.totalorder %s27, 0
      %p90 = por %p88, %p89
      %p91 = scmp.ne.s32.totalorder %s79, %s80
      %p92 = scmp.eq.s32.totalorder %s28, 1
      %p93 = por %p91, %p92
      %p95 = scmp.ne.s32.totalorder %s80, %s94
      %p96 = scmp.eq.s32.totalorder %s28, 0
      %p97 = por %p95, %p96
      %s99 = sadd.s32 %s98, 1
      %p102 = scmp.eq.s32.totalorder %s22, 1
      %p103 = scmp.ne.s32.totalorder %s98, %s100
      %p104 = scmp.eq.s32.totalorder %s22, 0
      %p105 = por %p103, %p104
      %p106 = scmp.ne.s32.totalorder %s98, %s100
      %p107 = scmp.eq.s32.totalorder %s27, 1
      %p108 = por %p106, %p107
      %p109 = scmp.ne.s32.totalorder %s100, %s101
      %p110 = scmp.eq.s32.totalorder %s27, 0
      %p111 = por %p109, %p110
      %p112 = scmp.ne.s32.totalorder %s100, %s101
      %p113 = scmp.eq.s32.totalorder %s28, 1
      %p114 = por %p112, %p113
      %p116 = scmp.ne.s32.totalorder %s101, %s115
      %p117 = scmp.eq.s32.totalorder %s28, 0
      %p118 = por %p116, %p117
      %s120 = sadd.s32 %s119, 1
      %p123 = scmp.eq.s32.totalorder %s22, 1
      %p124 = scmp.ne.s32.totalorder %s119, %s121
      %p125 = scmp.eq.s32.totalorder %s22, 0
      %p126 = por %p124, %p125
      %p127 = scmp.ne.s32.totalorder %s119, %s121
      %p128 = scmp.eq.s32.totalorder %s27, 1
      %p129 = por %p127, %p128
      %p130 = scmp.ne.s32.totalorder %s121, %s122
      %p131 = scmp.eq.s32.totalorder %s27, 0
      %p132 = por %p130, %p131
      %p133 = scmp.ne.s32.totalorder %s121, %s122
      %p134 = scmp.eq.s32.totalorder %s28, 1
      %p135 = por %p133, %p134
      %p137 = scmp.ne.s32.totalorder %s122, %s136
      %p138 = scmp.eq.s32.totalorder %s28, 0
      %p139 = por %p137, %p138
      %s141 = sadd.s32 %s140, 1
      %p144 = scmp.eq.s32.totalorder %s22, 1
      %p145 = scmp.ne.s32.totalorder %s140, %s142
      %p146 = scmp.eq.s32.totalorder %s22, 0
      %p147 = por %p145, %p146
      %p148 = scmp.ne.s32.totalorder %s140, %s142
      %p149 = scmp.eq.s32.totalorder %s27, 1
      %p150 = por %p148, %p149
      %p151 = scmp.ne.s32.totalorder %s142, %s143
      %p152 = scmp.eq.s32.totalorder %s27, 0
      %p153 = por %p151, %p152
      %p154 = scmp.ne.s32.totalorder %s142, %s143
      %p155 = scmp.eq.s32.totalorder %s28, 1
      %p156 = por %p154, %p155
      %p158 = scmp.ne.s32.totalorder %s143, %s157
      %p159 = scmp.eq.s32.totalorder %s28, 0
      %p160 = por %p158, %p159
      %s162 = sadd.s32 %s161, 1
      %p165 = scmp.eq.s32.totalorder %s22, 1
      %p166 = scmp.ne.s32.totalorder %s161, %s163
      %p167 = scmp.eq.s32.totalorder %s22, 0
      %p168 = por %p166, %p167
      %p169 = scmp.ne.s32.totalorder %s161, %s163
      %p170 = scmp.eq.s32.totalorder %s27, 1
      %p171 = por %p169, %p170
      %p172 = scmp.ne.s32.totalorder %s163, %s164
      %p173 = scmp.eq.s32.totalorder %s27, 0
      %p174 = por %p172, %p173
      %p175 = scmp.ne.s32.totalorder %s163, %s164
      %p176 = scmp.eq.s32.totalorder %s28, 1
      %p177 = por %p175, %p176
      %p179 = scmp.ne.s32.totalorder %s164, %s178
      %p180 = scmp.eq.s32.totalorder %s28, 0
      %p181 = por %p179, %p180
      %s182 = ssub.s32 %s22, %s29
      %p183 = scmp.eq.s32.totalorder %s182, 0
      %s185 = sadd.s32 %s184, 1
      %s186 = scalar_select %p183, %s184, %s185
      %p189 = pneg %p183
      %p190 = scmp.eq.s32.totalorder %s22, 1
      %p191 = por %p189, %p190
      %p192 = scmp.ne.s32.totalorder %s184, %s187
      %p193 = scmp.eq.s32.totalorder %s22, 0
      %p194 = por %p192, %p193
      %p195 = scmp.ne.s32.totalorder %s184, %s187
      %p196 = scmp.eq.s32.totalorder %s27, 1
      %p197 = por %p195, %p196
      %p198 = scmp.ne.s32.totalorder %s187, %s188
      %p199 = scmp.eq.s32.totalorder %s27, 0
      %p200 = por %p198, %p199
      %p201 = scmp.ne.s32.totalorder %s187, %s188
      %p202 = scmp.eq.s32.totalorder %s28, 1
      %p203 = por %p201, %p202
      %p205 = scmp.ne.s32.totalorder %s188, %s204
      %p206 = scmp.eq.s32.totalorder %s28, 0
      %p207 = por %p205, %p206
      %p208 = scmp.le.s32.totalorder 1, %s22
      %p209 = scmp.lt.s32.totalorder %s22, 3
      %p210 = pnand %p208, %p209
      %p211 = pneg %p210
      // Predicated region
      $region9: #{tpu_custom_call.1} parent=5 // pred_check
        _
      $region10: #{tpu_custom_call.1} parent=5 // pred_check_branch
        %213 = sbr.rel (%p210) target = $region12
      $region11: #{tpu_custom_call.1} parent=5 // pred_region
        %s214 = ssub.s32 %s22, 1
        // Predicated region
        $region13: #{tpu_custom_call.1} parent=11 // pred_check
          %p215 = pneg %p69
        $region14: #{tpu_custom_call.1} parent=11 // pred_check_branch
          %217 = sbr.rel (%p215) target = $region16
        $region15: #{tpu_custom_call.1} parent=11 // pred_region
          %219 = vsyncadd [#allocation6], 0
          %s220 = sshll.u32 %s1, 4
          %s221 = int_to_ptr.hbm [resolvable:$true] %s220
          %s222 = sshll.u32 [#allocation5], 4
          %s223 = int_to_ptr.vmem [resolvable:$true] %s222
          %228 = dma.hbm_to_vmem [thread:$0]  %s221, 384, %s223, [#allocation6], 128, 128, 8
        $region16: #{tpu_custom_call.1} parent=11 // pred_fallthru
          _
        // Predicated region
        $region17: #{tpu_custom_call.1} parent=11 // pred_check
          %p229 = pneg %p90
        $region18: #{tpu_custom_call.1} parent=11 // pred_check_branch
          %231 = sbr.rel (%p229) target = $region20
        $region19: #{tpu_custom_call.1} parent=11 // pred_region
          %233 = vsyncadd [#allocation6], 0
          %s235 = sshll.u32 %s2, 4
          %s236 = int_to_ptr.hbm [resolvable:$true] %s235
          %s237 = sshll.u32 [#allocation7], 4
          %s238 = int_to_ptr.vmem [resolvable:$true] %s237
          %240 = dma.hbm_to_vmem [thread:$0]  %s236, 128, %s238, [#allocation6]
        $region20: #{tpu_custom_call.1} parent=11 // pred_fallthru
          _
        // Predicated region
        $region21: #{tpu_custom_call.1} parent=11 // pred_check
          %p241 = pneg %p111
        $region22: #{tpu_custom_call.1} parent=11 // pred_check_branch
          %243 = sbr.rel (%p241) target = $region24
        $region23: #{tpu_custom_call.1} parent=11 // pred_region
          %245 = vsyncadd [#allocation9], 0
          %s246 = sshll.u32 %s3, 4
          %s247 = int_to_ptr.hbm [resolvable:$true] %s246
          %s248 = sshll.u32 [#allocation8], 4
          %s249 = int_to_ptr.vmem [resolvable:$true] %s248
          %254 = dma.hbm_to_vmem [thread:$0]  %s247, 288, %s249, [#allocation9], 32, 32, 2
        $region24: #{tpu_custom_call.1} parent=11 // pred_fallthru
          _
        // Predicated region
        $region25: #{tpu_custom_call.1} parent=11 // pred_check
          %p255 = pneg %p132
        $region26: #{tpu_custom_call.1} parent=11 // pred_check_branch
          %257 = sbr.rel (%p255) target = $region28
        $region27: #{tpu_custom_call.1} parent=11 // pred_region
          %259 = vsyncadd [#allocation9], 0
          %s261 = sshll.u32 %s4, 4
          %s262 = int_to_ptr.hbm [resolvable:$true] %s261
          %s263 = sshll.u32 [#allocation10], 4
          %s264 = int_to_ptr.vmem [resolvable:$true] %s263
          %266 = dma.hbm_to_vmem [thread:$0]  %s262, 128, %s264, [#allocation9]
        $region28: #{tpu_custom_call.1} parent=11 // pred_fallthru
          _
        // Predicated region
        $region29: #{tpu_custom_call.1} parent=11 // pred_check
          %p267 = pneg %p153
        $region30: #{tpu_custom_call.1} parent=11 // pred_check_branch
          %269 = sbr.rel (%p267) target = $region32
        $region31: #{tpu_custom_call.1} parent=11 // pred_region
          _
        $region32: #{tpu_custom_call.1} parent=11 // pred_fallthru
          _
        // Predicated region
        $region33: #{tpu_custom_call.1} parent=11 // pred_check
          %p270 = pneg %p174
        $region34: #{tpu_custom_call.1} parent=11 // pred_check_branch
          %272 = sbr.rel (%p270) target = $region36
        $region35: #{tpu_custom_call.1} parent=11 // pred_region
          %274 = vsyncadd [#allocation12], 0
          %s276 = sshll.u32 %s6, 4
          %s277 = int_to_ptr.hbm [resolvable:$true] %s276
          %s278 = sshll.u32 [#allocation11], 4
          %s279 = int_to_ptr.vmem [resolvable:$true] %s278
          %281 = dma.hbm_to_vmem [thread:$0]  %s277, 128, %s279, [#allocation12]
        $region36: #{tpu_custom_call.1} parent=11 // pred_fallthru
          _
      $region12: #{tpu_custom_call.1} parent=5 // pred_fallthru
        _
      %p282 = scmp.lt.s32.totalorder %s22, 2
      // Predicated region
      $region37: #{tpu_custom_call.1} parent=5 // pred_check
        %p283 = pneg %p282
      $region38: #{tpu_custom_call.1} parent=5 // pred_check_branch
        %285 = sbr.rel (%p283) target = $region40
      $region39: #{tpu_custom_call.1} parent=5 // pred_region
        // Predicated region
        $region41: #{tpu_custom_call.1} parent=39 // pred_check
          %p286 = pneg %p42
        $region42: #{tpu_custom_call.1} parent=39 // pred_check_branch
          %288 = sbr.rel (%p286) target = $region44
        $region43: #{tpu_custom_call.1} parent=39 // pred_region
          %s289 = sand.u32 %s32, 1
          %s290 = scalar_lea.sflag [#allocation3], %s289
          %s291 = sand.u32 %s32, 1
          %s292 = smul.addr %s291, 8
          %s293 = scalar_lea.vmem [#allocation2], %s292
          %295 = vsyncadd %s290, 0
          %s296 = smul.addr %s22, 2
          %s297 = smul.addr %s296, 4
          %s298 = scalar_lea.hbm %s0, %s297
          %s300 = sshll.u32 %s298, 4
          %s301 = int_to_ptr.hbm [resolvable:$true] %s300
          %s302 = sshll.u32 %s293, 4
          %s303 = int_to_ptr.vmem [resolvable:$true] %s302
          %305 = dma.hbm_to_vmem [thread:$0]  %s301, 128, %s303, %s290
        $region44: #{tpu_custom_call.1} parent=39 // pred_fallthru
          _
      $region40: #{tpu_custom_call.1} parent=5 // pred_fallthru
        _
      %p306 = scmp.le.s32.totalorder 1, %s22
      %p307 = scmp.lt.s32.totalorder %s22, 3
      %p308 = pnand %p306, %p307
      %p309 = pneg %p308
      // Predicated region
      $region45: #{tpu_custom_call.1} parent=5 // pred_check
        _
      $region46: #{tpu_custom_call.1} parent=5 // pred_check_branch
        %311 = sbr.rel (%p308) target = $region48
      $region47: #{tpu_custom_call.1} parent=5 // pred_region
        %s312 = ssub.s32 %s22, 1
        %s313 = sand.u32 %s35, 1
        %s314 = scalar_lea.sflag [#allocation3], %s313
        %s315 = sand.u32 %s35, 1
        %s316 = smul.addr %s315, 8
        %s317 = scalar_lea.vmem [#allocation2], %s316
        // Predicated region
        $region49: #{tpu_custom_call.1} parent=47 // pred_check
          %p318 = pneg %p48
        $region50: #{tpu_custom_call.1} parent=47 // pred_check_branch
          %320 = sbr.rel (%p318) target = $region52
        $region51: #{tpu_custom_call.1} parent=47 // pred_region
          %322 = dma.done %s314, 128
        $region52: #{tpu_custom_call.1} parent=47 // pred_fallthru
          _
        // Predicated region
        $region53: #{tpu_custom_call.1} parent=47 // pred_check
          %p323 = pneg %p69
        $region54: #{tpu_custom_call.1} parent=47 // pred_check_branch
          %325 = sbr.rel (%p323) target = $region56
        $region55: #{tpu_custom_call.1} parent=47 // pred_region
          %327 = dma.done [#allocation6], 384
        $region56: #{tpu_custom_call.1} parent=47 // pred_fallthru
          _
        // Predicated region
        $region57: #{tpu_custom_call.1} parent=47 // pred_check
          %p328 = pneg %p90
        $region58: #{tpu_custom_call.1} parent=47 // pred_check_branch
          %330 = sbr.rel (%p328) target = $region60
        $region59: #{tpu_custom_call.1} parent=47 // pred_region
          %332 = dma.done [#allocation6], 128
        $region60: #{tpu_custom_call.1} parent=47 // pred_fallthru
          _
        // Predicated region
        $region61: #{tpu_custom_call.1} parent=47 // pred_check
          %p333 = pneg %p111
        $region62: #{tpu_custom_call.1} parent=47 // pred_check_branch
          %335 = sbr.rel (%p333) target = $region64
        $region63: #{tpu_custom_call.1} parent=47 // pred_region
          %337 = dma.done [#allocation9], 288
        $region64: #{tpu_custom_call.1} parent=47 // pred_fallthru
          _
        // Predicated region
        $region65: #{tpu_custom_call.1} parent=47 // pred_check
          %p338 = pneg %p132
        $region66: #{tpu_custom_call.1} parent=47 // pred_check_branch
          %340 = sbr.rel (%p338) target = $region68
        $region67: #{tpu_custom_call.1} parent=47 // pred_region
          %342 = dma.done [#allocation9], 128
        $region68: #{tpu_custom_call.1} parent=47 // pred_fallthru
          _
        // Predicated region
        $region69: #{tpu_custom_call.1} parent=47 // pred_check
          %p343 = pneg %p174
        $region70: #{tpu_custom_call.1} parent=47 // pred_check_branch
          %345 = sbr.rel (%p343) target = $region72
        $region71: #{tpu_custom_call.1} parent=47 // pred_region
          %347 = dma.done [#allocation12], 128
        $region72: #{tpu_custom_call.1} parent=47 // pred_fallthru
          _
        %s348 = sand.u32 %s35, 1
        %s349 = scalar_lea.sflag [#allocation3], %s348
        %s350 = sand.u32 %s35, 1
        %s351 = smul.addr %s350, 8
        %s352 = scalar_lea.vmem [#allocation2], %s351
        %p353 = pneg %p48
        %p354 = pneg %p45
        %p355 = pneg %p69
        %p356 = pneg %p66
        %p357 = pneg %p90
        %p358 = pneg %p87
        %p359 = pneg %p111
        %p360 = pneg %p108
        %p361 = pneg %p132
        %p362 = pneg %p129
        %p363 = pneg %p153
        %p364 = pneg %p150
        %p365 = pneg %p174
        %p366 = pneg %p171
        %p367 = pneg %p200
        %p368 = pneg %p197
        %s369 = sand.u32 %s187, 1
        %s370 = scalar_lea.sflag [#allocation4], %s369
        %s371 = sand.u32 %s187, 1
        %s372 = smul.addr %s371, 8
        %s373 = scalar_lea.vmem [#allocation13], %s372
        %v374 = vld [vmem:[#allocation5] sm:$0xff]
        %s375 = scalar_lea.vmem [#allocation5], 8
        %v376 = vld [vmem:[%s375] sm:$0xff]
        %s377 = scalar_lea.vmem [#allocation5], 16
        %v378 = vld [vmem:[%s377] sm:$0xff]
        %v379 = vld [vmem:[#allocation7] sm:$0xff]
        %v380 = vld [vmem:[#allocation10] sm:$0xff]
        %v381 = vld [vmem:[%s5] sm:$0x1]
        %v382 = vld [vmem:[#allocation11] sm:$0xff]
        %v383 = vld [vmem:[%s317] sm:$0xff]
        %v384 = vunpack.c.l.bf16 %v383
        %v385 = vunpack.c.h.bf16 %v383
        %387 = vset.pattern.permute.xlu0 0
        %388 = vperm.xlu0 %387, %v379
        %v389 = vpop.permute.xlu0 %388
        %vm391 = vcmask 64512
        %v393 = vsel %vm391, %v374, 0
        %395 = vmatpush.msra.mxu0 0.0
        %396 = vmatpush.msra.mxu0 0.0
        %397 = vmatpush.msra.mxu0 0.0
        %398 = vmatpush.msra.mxu0 0.0
        %399 = vmatpush.msra.mxu0 0.0
        %400 = vmatpush.msra.mxu0 0.0
        %401 = vmatpush.msra.mxu0 0.0
        %402 = vmatpush.msra.mxu0 0.0
        %403 = vmatpush.msra.mxu0 0.0
        %404 = vmatpush.msra.mxu0 0.0
        %405 = vmatpush.msra.mxu0 0.0
        %406 = vmatpush.msra.mxu0 0.0
        %407 = vmatpush.msra.mxu0 0.0
        %408 = vmatpush.msra.mxu0 0.0
        %409 = vmatpush.msra.mxu0 0.0
        %410 = vmatpush.msra.mxu0 %v384
        %411 = vmatmul.f32.gmra.mxu0 %v393
        %v412 = vpop.f32.mrf.mxu0
        %v413 = vadd.f32 %v389, %v412
        %414 = vdwg.mxu0
        %415 = vmatpush.msra.mxu0 0.0
        %416 = vmatpush.msra.mxu0 0.0
        %417 = vmatpush.msra.mxu0 0.0
        %418 = vmatpush.msra.mxu0 0.0
        %419 = vmatpush.msra.mxu0 0.0
        %420 = vmatpush.msra.mxu0 0.0
        %421 = vmatpush.msra.mxu0 0.0
        %422 = vmatpush.msra.mxu0 0.0
        %423 = vmatpush.msra.mxu0 0.0
        %424 = vmatpush.msra.mxu0 0.0
        %425 = vmatpush.msra.mxu0 0.0
        %426 = vmatpush.msra.mxu0 0.0
        %427 = vmatpush.msra.mxu0 0.0
        %428 = vmatpush.msra.mxu0 0.0
        %429 = vmatpush.msra.mxu0 0.0
        %430 = vmatpush.msra.mxu0 %v385
        %431 = vmatmul.f32.gmra.mxu0 %v393
        %v432 = vpop.f32.mrf.mxu0
        %v433 = vadd.f32 %v389, %v432
        %434 = vdwg.mxu0
        %435 = vrot.lane.b32.xlu0 %v413, 16
        %v436 = vpop.permute.xlu0 %435
        %437 = vrot.lane.b32.xlu0 %v433, 16
        %v438 = vpop.permute.xlu0 %437
        %v439 = vlaneseq
        %v440 = vand.u32 %v439, 127
        %vm441 = vcmp.lt.s32.totalorder %v440, 16
        %v442 = vsel %vm441, %v436, %v438
        %v443 = vsel %vm441, %v438, %v436
        %444 = vrot.lane.b32.xlu0 %v413, 112
        %v445 = vpop.permute.xlu0 %444
        %446 = vrot.lane.b32.xlu0 %v433, 112
        %v447 = vpop.permute.xlu0 %446
        %vm448 = vcmp.lt.s32.totalorder %v440, 112
        %v449 = vsel %vm448, %v445, %v447
        %v450 = vsel %vm448, %v447, %v445
        %451 = vset.pattern.permute.xlu0 5
        %452 = vperm.xlu0 %451, %v379
        %v453 = vpop.permute.xlu0 %452
        %v455 = vmul.f32 %v413, %v453
        %v456 = vmul.f32 %v433, %v453
        %457 = vrot.lane.b32.xlu0 %v443, 1
        %v458 = vpop.permute.xlu0 %457
        %459 = vrot.lane.b32.xlu0 %v442, 1
        %v460 = vpop.permute.xlu0 %459
        %vm461 = vcmp.lt.s32.totalorder %v440, 1
        %v462 = vsel %vm461, %v458, %v460
        %v463 = vsel %vm461, %v460, %v458
        %v464 = vld [vmem:[#allocation8] sm:$0x3]
        %v466 = vperm.slane %v464, 0
        %v467 = vperm.slane %v464, 1
        %v470 = vmul.f32 %v463, %v466
        %v471 = vmul.f32 %v462, %v467
        %472 = vset.pattern.permute.xlu0 1
        %473 = vperm.xlu0 %472, %v379
        %v474 = vpop.permute.xlu0 %473
        %v476 = vmul.f32 %v470, %v474
        %v477 = vmul.f32 %v471, %v474
        %v478 = vadd.f32 %v455, %v476
        %v479 = vadd.f32 %v456, %v477
        %s480 = scalar_lea.vmem [#allocation8], 2
        %v481 = vld [vmem:[%s480] sm:$0x3]
        %v483 = vperm.slane %v481, 0
        %v484 = vperm.slane %v481, 1
        %v487 = vmul.f32 %v443, %v483
        %v488 = vmul.f32 %v442, %v484
        %489 = vset.pattern.permute.xlu0 2
        %490 = vperm.xlu0 %489, %v379
        %v491 = vpop.permute.xlu0 %490
        %v493 = vmul.f32 %v487, %v491
        %v494 = vmul.f32 %v488, %v491
        %v495 = vadd.f32 %v478, %v493
        %v496 = vadd.f32 %v479, %v494
        %497 = vrot.lane.b32.xlu0 %v443, 127
        %v498 = vpop.permute.xlu0 %497
        %499 = vrot.lane.b32.xlu0 %v442, 127
        %v500 = vpop.permute.xlu0 %499
        %vm501 = vcmp.lt.s32.totalorder %v440, 127
        %v502 = vsel %vm501, %v498, %v500
        %v503 = vsel %vm501, %v500, %v498
        %s504 = scalar_lea.vmem [#allocation8], 4
        %v505 = vld [vmem:[%s504] sm:$0x3]
        %v507 = vperm.slane %v505, 0
        %v508 = vperm.slane %v505, 1
        %v511 = vmul.f32 %v502, %v507
        %v512 = vmul.f32 %v503, %v508
        %513 = vset.pattern.permute.xlu0 3
        %514 = vperm.xlu0 %513, %v379
        %v515 = vpop.permute.xlu0 %514
        %v517 = vmul.f32 %v511, %v515
        %v518 = vmul.f32 %v512, %v515
        %v519 = vadd.f32 %v495, %v517
        %v520 = vadd.f32 %v496, %v518
        %521 = vrot.lane.b32.xlu0 %v413, 1
        %v522 = vpop.permute.xlu0 %521
        %523 = vrot.lane.b32.xlu0 %v433, 1
        %v524 = vpop.permute.xlu0 %523
        %v525 = vsel %vm461, %v522, %v524
        %v526 = vsel %vm461, %v524, %v522
        %s527 = scalar_lea.vmem [#allocation8], 6
        %v528 = vld [vmem:[%s527] sm:$0x3]
        %v530 = vperm.slane %v528, 0
        %v531 = vperm.slane %v528, 1
        %v534 = vmul.f32 %v526, %v530
        %v535 = vmul.f32 %v525, %v531
        %536 = vset.pattern.permute.xlu0 4
        %537 = vperm.xlu0 %536, %v379
        %v538 = vpop.permute.xlu0 %537
        %v540 = vmul.f32 %v534, %v538
        %v541 = vmul.f32 %v535, %v538
        %v542 = vadd.f32 %v519, %v540
        %v543 = vadd.f32 %v520, %v541
        %544 = vrot.lane.b32.xlu0 %v413, 127
        %v545 = vpop.permute.xlu0 %544
        %546 = vrot.lane.b32.xlu0 %v433, 127
        %v547 = vpop.permute.xlu0 %546
        %v548 = vsel %vm501, %v545, %v547
        %v549 = vsel %vm501, %v547, %v545
        %s550 = scalar_lea.vmem [#allocation8], 10
        %v551 = vld [vmem:[%s550] sm:$0x3]
        %v553 = vperm.slane %v551, 0
        %v554 = vperm.slane %v551, 1
        %v557 = vmul.f32 %v548, %v553
        %v558 = vmul.f32 %v549, %v554
        %559 = vset.pattern.permute.xlu0 6
        %560 = vperm.xlu0 %559, %v379
        %v561 = vpop.permute.xlu0 %560
        %v563 = vmul.f32 %v557, %v561
        %v564 = vmul.f32 %v558, %v561
        %v565 = vadd.f32 %v542, %v563
        %v566 = vadd.f32 %v543, %v564
        %567 = vrot.lane.b32.xlu0 %v449, 1
        %v568 = vpop.permute.xlu0 %567
        %569 = vrot.lane.b32.xlu0 %v450, 1
        %v570 = vpop.permute.xlu0 %569
        %v571 = vsel %vm461, %v568, %v570
        %v572 = vsel %vm461, %v570, %v568
        %s573 = scalar_lea.vmem [#allocation8], 12
        %v574 = vld [vmem:[%s573] sm:$0x3]
        %v576 = vperm.slane %v574, 0
        %v577 = vperm.slane %v574, 1
        %v580 = vmul.f32 %v572, %v576
        %v581 = vmul.f32 %v571, %v577
        %582 = vset.pattern.permute.xlu0 7
        %583 = vperm.xlu0 %582, %v379
        %v584 = vpop.permute.xlu0 %583
        %v586 = vmul.f32 %v580, %v584
        %v587 = vmul.f32 %v581, %v584
        %v588 = vadd.f32 %v565, %v586
        %v589 = vadd.f32 %v566, %v587
        %s590 = scalar_lea.vmem [#allocation8], 14
        %v591 = vld [vmem:[%s590] sm:$0x3]
        %v593 = vperm.slane %v591, 0
        %v594 = vperm.slane %v591, 1
        %v597 = vmul.f32 %v449, %v593
        %v598 = vmul.f32 %v450, %v594
        %599 = vset.pattern.permute.xlu0 8
        %600 = vperm.xlu0 %599, %v379
        %v601 = vpop.permute.xlu0 %600
        %v603 = vmul.f32 %v597, %v601
        %v604 = vmul.f32 %v598, %v601
        %v605 = vadd.f32 %v588, %v603
        %v606 = vadd.f32 %v589, %v604
        %607 = vrot.lane.b32.xlu0 %v449, 127
        %v608 = vpop.permute.xlu0 %607
        %609 = vrot.lane.b32.xlu0 %v450, 127
        %v610 = vpop.permute.xlu0 %609
        %v611 = vsel %vm501, %v608, %v610
        %v612 = vsel %vm501, %v610, %v608
        %s613 = scalar_lea.vmem [#allocation8], 16
        %v614 = vld [vmem:[%s613] sm:$0x3]
        %v616 = vperm.slane %v614, 0
        %v617 = vperm.slane %v614, 1
        %v620 = vmul.f32 %v611, %v616
        %v621 = vmul.f32 %v612, %v617
        %622 = vset.pattern.permute.xlu0 9
        %623 = vperm.xlu0 %622, %v379
        %v624 = vpop.permute.xlu0 %623
        %v626 = vmul.f32 %v620, %v624
        %v627 = vmul.f32 %v621, %v624
        %v628 = vadd.f32 %v605, %v626
        %v629 = vadd.f32 %v606, %v627
        %630 = vset.pattern.permute.xlu0 10
        %631 = vperm.xlu0 %630, %v379
        %v632 = vpop.permute.xlu0 %631
        %v634 = vadd.f32 %v628, %v632
        %v635 = vadd.f32 %v629, %v632
        %v636 = vmul.f32 %v634, %v634
        %v637 = vmul.f32 %v635, %v635
        %v638 = vmul.f32 %v634, %v636
        %v639 = vmul.f32 %v635, %v637
        %v640 = vmul.f32 %v638, 0.044715
        %v641 = vmul.f32 %v639, 0.044715
        %v642 = vadd.f32 %v634, %v640
        %v643 = vadd.f32 %v635, %v641
        %v644 = vmul.f32 %v642, 0.7978846
        %v645 = vmul.f32 %v643, 0.7978846
        %v646 = vtanh.pop %v644
        %v647 = vtanh.pop %v645
        %v648 = vadd.f32 %v646, 1.0
        %v649 = vadd.f32 %v647, 1.0
        %v650 = vmul.f32 %v648, 0.5
        %v651 = vmul.f32 %v649, 0.5
        %v652 = vmul.f32 %v634, %v650
        %v653 = vmul.f32 %v635, %v651
        %654 = vset.pattern.permute.xlu0 11
        %655 = vperm.xlu0 %654, %v379
        %v656 = vpop.permute.xlu0 %655
        %v659 = vsel %vm391, %v376, 0
        %661 = vmatpush.msra.mxu0 0.0
        %662 = vmatpush.msra.mxu0 0.0
        %663 = vmatpush.msra.mxu0 0.0
        %664 = vmatpush.msra.mxu0 0.0
        %665 = vmatpush.msra.mxu0 0.0
        %666 = vmatpush.msra.mxu0 0.0
        %667 = vmatpush.msra.mxu0 0.0
        %668 = vmatpush.msra.mxu0 0.0
        %669 = vmatpush.msra.mxu0 0.0
        %670 = vmatpush.msra.mxu0 0.0
        %671 = vmatpush.msra.mxu0 0.0
        %672 = vmatpush.msra.mxu0 0.0
        %673 = vmatpush.msra.mxu0 0.0
        %674 = vmatpush.msra.mxu0 0.0
        %675 = vmatpush.msra.mxu0 0.0
        %676 = vmatpush.msra.mxu0 %v652
        %677 = vmatmul.f32.gmra.mxu0 %v659
        %v678 = vpop.f32.mrf.mxu0
        %v679 = vadd.f32 %v656, %v678
        %680 = vdwg.mxu0
        %681 = vmatpush.msra.mxu0 0.0
        %682 = vmatpush.msra.mxu0 0.0
        %683 = vmatpush.msra.mxu0 0.0
        %684 = vmatpush.msra.mxu0 0.0
        %685 = vmatpush.msra.mxu0 0.0
        %686 = vmatpush.msra.mxu0 0.0
        %687 = vmatpush.msra.mxu0 0.0
        %688 = vmatpush.msra.mxu0 0.0
        %689 = vmatpush.msra.mxu0 0.0
        %690 = vmatpush.msra.mxu0 0.0
        %691 = vmatpush.msra.mxu0 0.0
        %692 = vmatpush.msra.mxu0 0.0
        %693 = vmatpush.msra.mxu0 0.0
        %694 = vmatpush.msra.mxu0 0.0
        %695 = vmatpush.msra.mxu0 0.0
        %696 = vmatpush.msra.mxu0 %v653
        %697 = vmatmul.f32.gmra.mxu0 %v659
        %v698 = vpop.f32.mrf.mxu0
        %v699 = vadd.f32 %v656, %v698
        %700 = vdwg.mxu0
        %v701 = vadd.f32 %v679, %v413
        %v702 = vadd.f32 %v699, %v433
        %v703 = vadd.f32 %v701, %v702
        %704 = vadd.xlane.f32.xlu0 %v703
        %v705 = vpop.xlane.xlu0 %704
        %v706 = vrcp.pop 256.0
        %v707 = vmul.f32 256.0, %v706
        %v708 = vsub.f32 1.0, %v707
        %v709 = vmul.f32 %v706, %v708
        %v710 = vadd.f32 %v706, %v709
        %vm711 = vweird.f32 %v706
        %v712 = vsel %vm711, %v706, %v710
        %v713 = vmul.f32 %v705, %v712
        %v714 = vmul.f32 %v380, %v713
        %v715 = vrot.slane %v714, 4
        %v716 = vadd.f32 %v714, %v715
        %v717 = vrot.slane %v716, 2
        %v718 = vadd.f32 %v716, %v717
        %v719 = vrot.slane %v718, 1
        %v720 = vadd.f32 %v718, %v719
        %v721 = vadd.f32 %v720, %v381
        %v722 = vmax.f32 %v721, 0.0
        %v723 = vperm.slane %v722, 0
        %v724 = vmul.f32 %v382, %v723
        %725 = vadd.xlane.f32.xlu0 %v724
        %v726 = vpop.xlane.xlu0 %725
        %v727 = vadd.f32 %v726, %v379
        %v728 = vxor.u32 %v727, 2147483648
        %v729 = vmul.f32 %v728, 1.442695
        %v730 = vpow.pop %v729
        %v731 = vadd.f32 %v730, 1.0
        %v732 = vrcp.pop %v731
        %v733 = vmul.f32 %v731, %v732
        %v734 = vsub.f32 1.0, %v733
        %v735 = vmul.f32 %v732, %v734
        %v736 = vadd.f32 %v732, %v735
        %vm737 = vweird.f32 %v731
        %vm738 = vweird.f32 %v732
        %vm739 = vmor %vm737, %vm738
        %v740 = vsel %vm739, %v732, %v736
        %v741 = vand.u32 2147483647, %v731
        %vm742 = vcmp.eq.f32.partialorder %v741, 8.507059e+37
        %v743 = vand.u32 %v731, 2147483648
        %v744 = vor.u32 1.1754944e-38, %v743
        %v745 = vsel %vm742, %v744, %v740
        %v746 = vmul.f32 1.0, %v745
        %748 = vset.pattern.permute.xlu0 12
        %749 = vperm.xlu0 %748, %v746
        %v750 = vpop.permute.xlu0 %749
        %v752 = vmul.f32 %v701, %v750
        %v753 = vmul.f32 %v702, %v750
        %754 = vset.pattern.permute.xlu0 13
        %755 = vperm.xlu0 %754, %v379
        %v756 = vpop.permute.xlu0 %755
        %v759 = vsel %vm391, %v378, 0
        %761 = vmatpush.msra.mxu0 0.0
        %762 = vmatpush.msra.mxu0 0.0
        %763 = vmatpush.msra.mxu0 0.0
        %764 = vmatpush.msra.mxu0 0.0
        %765 = vmatpush.msra.mxu0 0.0
        %766 = vmatpush.msra.mxu0 0.0
        %767 = vmatpush.msra.mxu0 0.0
        %768 = vmatpush.msra.mxu0 0.0
        %769 = vmatpush.msra.mxu0 0.0
        %770 = vmatpush.msra.mxu0 0.0
        %771 = vmatpush.msra.mxu0 0.0
        %772 = vmatpush.msra.mxu0 0.0
        %773 = vmatpush.msra.mxu0 0.0
        %774 = vmatpush.msra.mxu0 0.0
        %775 = vmatpush.msra.mxu0 0.0
        %776 = vmatpush.msra.mxu0 %v752
        %777 = vmatmul.f32.gmra.mxu0 %v759
        %v778 = vpop.f32.mrf.mxu0
        %v779 = vadd.f32 %v756, %v778
        %780 = vdwg.mxu0
        %781 = vmatpush.msra.mxu0 0.0
        %782 = vmatpush.msra.mxu0 0.0
        %783 = vmatpush.msra.mxu0 0.0
        %784 = vmatpush.msra.mxu0 0.0
        %785 = vmatpush.msra.mxu0 0.0
        %786 = vmatpush.msra.mxu0 0.0
        %787 = vmatpush.msra.mxu0 0.0
        %788 = vmatpush.msra.mxu0 0.0
        %789 = vmatpush.msra.mxu0 0.0
        %790 = vmatpush.msra.mxu0 0.0
        %791 = vmatpush.msra.mxu0 0.0
        %792 = vmatpush.msra.mxu0 0.0
        %793 = vmatpush.msra.mxu0 0.0
        %794 = vmatpush.msra.mxu0 0.0
        %795 = vmatpush.msra.mxu0 0.0
        %796 = vmatpush.msra.mxu0 %v753
        %797 = vmatmul.f32.gmra.mxu0 %v759
        %v798 = vpop.f32.mrf.mxu0
        %v799 = vadd.f32 %v756, %v798
        %800 = vdwg.mxu0
        %v801 = vadd.f32 %v779, %v384
        %v802 = vadd.f32 %v799, %v385
        %v803 = vpack.c.bf16 %v802, %v801
        %804 = vst [vmem:[%s373] sm:$0xff] %v803
        %s805 = sand.u32 %s187, 1
        %s806 = scalar_lea.sflag [#allocation4], %s805
        %s807 = sand.u32 %s187, 1
        %s808 = smul.addr %s807, 8
        %s809 = scalar_lea.vmem [#allocation13], %s808
        // Predicated region
        $region73: #{tpu_custom_call.1} parent=47 // pred_check
          %p810 = pneg %p197
        $region74: #{tpu_custom_call.1} parent=47 // pred_check_branch
          %812 = sbr.rel (%p810) target = $region76
        $region75: #{tpu_custom_call.1} parent=47 // pred_region
          %814 = vsyncadd %s806, 0
          %s815 = smul.addr %s27, 2
          %s816 = smul.addr %s815, 4
          %s817 = scalar_lea.hbm %s7, %s816
          %s819 = sshll.u32 %s809, 4
          %s820 = int_to_ptr.vmem [resolvable:$true] %s819
          %s821 = sshll.u32 %s817, 4
          %s822 = int_to_ptr.hbm [resolvable:$true] %s821
          %824 = dma.vmem_to_hbm [thread:$0]  %s820, 128, %s822, %s806
        $region76: #{tpu_custom_call.1} parent=47 // pred_fallthru
          _
      $region48: #{tpu_custom_call.1} parent=5 // pred_fallthru
        _
      %p825 = scmp.le.s32.totalorder 2, %s22
      // Predicated region
      $region77: #{tpu_custom_call.1} parent=5 // pred_check
        %p826 = pneg %p825
      $region78: #{tpu_custom_call.1} parent=5 // pred_check_branch
        %828 = sbr.rel (%p826) target = $region80
      $region79: #{tpu_custom_call.1} parent=5 // pred_region
        %s829 = ssub.s32 %s22, 2
        // Predicated region
        $region81: #{tpu_custom_call.1} parent=79 // pred_check
          %p830 = pneg %p203
        $region82: #{tpu_custom_call.1} parent=79 // pred_check_branch
          %832 = sbr.rel (%p830) target = $region84
        $region83: #{tpu_custom_call.1} parent=79 // pred_region
          %s833 = sand.u32 %s188, 1
          %s834 = scalar_lea.sflag [#allocation4], %s833
          %s835 = sand.u32 %s188, 1
          %s836 = smul.addr %s835, 8
          %s837 = scalar_lea.vmem [#allocation13], %s836
          %839 = dma.done %s834, 128
        $region84: #{tpu_custom_call.1} parent=79 // pred_fallthru
          _
      $region80: #{tpu_custom_call.1} parent=5 // pred_fallthru
        _
    $region6: #{tpu_custom_call.1} parent=1 // loop_footer
      %s26 = sadd.s32 1, %s22
    $region7: #{tpu_custom_call.1} parent=1 // loop_footer_branch
      %21 = sbr.rel target = $region3
    $region8: #{tpu_custom_call.1} parent=1 // loop_exit
      _
    %840 = vsyncpa [#allocation3], 1
    %s841 = scalar_lea.sflag [#allocation3], 1
    %842 = vsyncpa %s841, 1
    %843 = vsyncpa [#allocation6], 1
    %844 = vsyncpa [#allocation9], 1
    %845 = vsyncpa [#allocation12], 1
    %846 = vsyncpa [#allocation4], 1
    %s847 = scalar_lea.sflag [#allocation4], 1
    %848 = vsyncpa %s847, 1

</llo_original>
